<compile_context>
chip_gen: v5e
topology: v5e:2x2
jax: 0.10.0
libtpu: 0.0.40
codegen_flags: <defaults>
</compile_context>

<pallas_src>
import functools

import jax
import jax.numpy as jnp
from jax import lax
from jax.experimental import pallas as pl
from jax.experimental.pallas import tpu as pltpu


# ------------------------------- kernel ------------------------------------ #

def _lm_head_kernel(x_ref, w_ref, o_ref, acc_ref):
    """Compute one (tm, tn) logits tile; grid axis 2 reduces over n_embd.

    x_ref : (tm, tk)  hidden-state tile
    w_ref : (tn, tk)  embedding-weight tile, native (vocab, n_embd) layout;
                      the Linear transpose is expressed via dot_general
                      contraction dims (contract both last dims) so the MXU
                      absorbs it for free.
    """
    @pl.when(pl.program_id(2) == 0)
    def _init():
        acc_ref[...] = jnp.zeros_like(acc_ref)

    acc_ref[...] += lax.dot_general(
        x_ref[...], w_ref[...],
        dimension_numbers=(((1,), (1,)), ((), ())),
        preferred_element_type=jnp.float32)

    @pl.when(pl.program_id(2) == pl.num_programs(2) - 1)
    def _store():
        o_ref[...] = acc_ref[...].astype(o_ref.dtype)


# ------------------------------- wrapper ------------------------------------ #

def _pick_tile(dim, target, align):
    """Largest tile <= target that divides `dim` and is a multiple of `align`
    (or the full dim if dim <= target / no aligned divisor exists)."""
    if dim <= target:
        return dim
    t = (target // align) * align
    while t >= align:
        if dim % t == 0:
            return t
        t -= align
    return dim


def lm_head_forward(hidden_state, embedding_weights, *,
                    block_m=256, block_n=512, block_k=512):
    """SKIPLESSLMHead.forward: logits = hidden_state @ embedding_weights.T

    hidden_state      : (B, T, n_embd)   (also accepts (M, n_embd))
    embedding_weights : (vocab, n_embd)  -- tied decoder weight, not transposed
    returns           : (B, T, vocab)
    """
    orig_shape = hidden_state.shape
    n_embd = orig_shape[-1]
    x2d = hidden_state.reshape(-1, n_embd)
    M, K = x2d.shape
    V, K2 = embedding_weights.shape
    assert K == K2, "hidden dim must match embedding dim"

    tm = _pick_tile(M, block_m, 8)      # sublane-aligned
    tn = _pick_tile(V, block_n, 128)    # lane-dense output tiles
    tk = _pick_tile(K, block_k, 128)    # lane-dense contraction tiles

    grid = (M // tm, V // tn, K // tk)

    out2d = pl.pallas_call(
        _lm_head_kernel,
        out_shape=jax.ShapeDtypeStruct((M, V), hidden_state.dtype),
        grid_spec=pltpu.PrefetchScalarGridSpec(
            num_scalar_prefetch=0,
            grid=grid,
            in_specs=[
                pl.BlockSpec((tm, tk), lambda i, j, k: (i, k)),
                pl.BlockSpec((tn, tk), lambda i, j, k: (j, k)),
            ],
            out_specs=pl.BlockSpec((tm, tn), lambda i, j, k: (i, j)),
            scratch_shapes=[pltpu.VMEM((tm, tn), jnp.float32)],
        ),
        compiler_params=pltpu.CompilerParams(
            dimension_semantics=("parallel", "parallel", "arbitrary"),
            vmem_limit_bytes=64 * 1024 * 1024),
    )(x2d, embedding_weights)

    return out2d.reshape(*orig_shape[:-1], V)


# --------------------------- pure-JAX reference ----------------------------- #

def reference(hidden_state, embedding_weights):
    return jnp.einsum("...k,vk->...v", hidden_state, embedding_weights)


# --------------------------------- main -------------------------------------- #

if __name__ == "__main__":
    # Small shapes consistent with the module: batch=2, seq=64, n_embd=256,
    # vocab=1024.  block_n=512 / block_k=128 exercise a (1, 2, 2) grid with a
    # real K-reduction through the VMEM accumulator.
    B, T, n_embd, vocab = 2, 64, 256, 1024

    key = jax.random.PRNGKey(0)
    k_w, k_h = jax.random.split(key)
    embedding_weights = jax.random.normal(k_w, (vocab, n_embd), jnp.float32) * 0.02
    hidden_state = jax.random.normal(k_h, (B, T, n_embd), jnp.float32)

    logits = lm_head_forward(hidden_state, embedding_weights,
                             block_m=128, block_n=512, block_k=128)
    jax.block_until_ready(logits)

    logits_ref = reference(hidden_state, embedding_weights)
    assert logits.shape == (B, T, vocab)
    assert jnp.allclose(logits, logits_ref, atol=1e-4, rtol=1e-4), \
        "mismatch vs JAX reference"

    print("KERNEL_OK")
</pallas_src>

<mosaic_0001>
module attributes {stable_mosaic.version = 11 : i64} {
  func.func @_lm_head_kernel(%arg0: i32, %arg1: i32, %arg2: i32, %arg3: memref<128x128xf32, #tpu.memory_space<vmem>>, %arg4: memref<512x128xf32, #tpu.memory_space<vmem>>, %arg5: memref<128x512xf32, #tpu.memory_space<vmem>>, %arg6: memref<128x512xf32, #tpu.memory_space<vmem>>) attributes {dimension_semantics = [#tpu.dimension_semantics<parallel>, #tpu.dimension_semantics<parallel>, #tpu.dimension_semantics<arbitrary>], iteration_bounds = array<i64: 1, 2, 2>, scalar_prefetch = 0 : i64, scratch_operands = 1 : i64, tpu.core_type = #tpu.core_type<tc>, window_params = [{transform_indices = @transform_0, window_bounds = array<i64: 128, 128>}, {transform_indices = @transform_1, window_bounds = array<i64: 512, 128>}, {transform_indices = @transform_2, window_bounds = array<i64: 128, 512>}]} {
    %c0_i32 = arith.constant 0 : i32
    %0 = arith.cmpi eq, %arg2, %c0_i32 : i32
    %1 = arith.extui %0 : i1 to i32
    %c0_i32_0 = arith.constant 0 : i32
    %2 = arith.cmpi ne, %1, %c0_i32_0 : i32
    scf.if %2 {
      %cst_9 = arith.constant 0.000000e+00 : f32
      %12 = vector.broadcast %cst_9 : f32 to vector<128x512xf32>
      %c0_10 = arith.constant 0 : index
      %c0_11 = arith.constant 0 : index
      %13 = vector.load %arg6[%c0_10, %c0_11] : memref<128x512xf32, #tpu.memory_space<vmem>>, vector<128x512xf32>
      tpu.vector_store %arg6[%c0_10, %c0_11], %12 {strides = array<i32>} : memref<128x512xf32, #tpu.memory_space<vmem>>, vector<128x512xf32>,
    } else {
    }
    %c0 = arith.constant 0 : index
    %c0_1 = arith.constant 0 : index
    %3 = vector.load %arg6[%c0, %c0_1] : memref<128x512xf32, #tpu.memory_space<vmem>>, vector<128x512xf32>
    %c0_2 = arith.constant 0 : index
    %c0_3 = arith.constant 0 : index
    %4 = vector.load %arg3[%c0_2, %c0_3] : memref<128x128xf32, #tpu.memory_space<vmem>>, vector<128x128xf32>
    %c0_4 = arith.constant 0 : index
    %c0_5 = arith.constant 0 : index
    %5 = vector.load %arg4[%c0_4, %c0_5] : memref<512x128xf32, #tpu.memory_space<vmem>>, vector<512x128xf32>
    %cst = arith.constant dense<0.000000e+00> : vector<128x512xf32>
    %6 = tpu.matmul %4, %5, %cst {dimension_numbers = #tpu.dot_dimension_numbers<[1], [1], [0], [0], [0, 0, 1, 0], [], []>} : vector<128x128xf32>, vector<512x128xf32>, vector<128x512xf32> -> vector<128x512xf32>
    %7 = arith.addf %3, %6 : vector<128x512xf32>
    %c0_6 = arith.constant 0 : index
    %c0_7 = arith.constant 0 : index
    %8 = vector.load %arg6[%c0_6, %c0_7] : memref<128x512xf32, #tpu.memory_space<vmem>>, vector<128x512xf32>
    tpu.vector_store %arg6[%c0_6, %c0_7], %7 {strides = array<i32>} : memref<128x512xf32, #tpu.memory_space<vmem>>, vector<128x512xf32>,
    %c1_i32 = arith.constant 1 : i32
    %9 = arith.cmpi eq, %arg2, %c1_i32 : i32
    %10 = arith.extui %9 : i1 to i32
    %c0_i32_8 = arith.constant 0 : i32
    %11 = arith.cmpi ne, %10, %c0_i32_8 : i32
    scf.if %11 {
      %c0_9 = arith.constant 0 : index
      %c0_10 = arith.constant 0 : index
      %12 = vector.load %arg6[%c0_9, %c0_10] : memref<128x512xf32, #tpu.memory_space<vmem>>, vector<128x512xf32>
      %c0_11 = arith.constant 0 : index
      %c0_12 = arith.constant 0 : index
      %13 = vector.load %arg5[%c0_11, %c0_12] : memref<128x512xf32, #tpu.memory_space<vmem>>, vector<128x512xf32>
      tpu.vector_store %arg5[%c0_11, %c0_12], %12 {strides = array<i32>} : memref<128x512xf32, #tpu.memory_space<vmem>>, vector<128x512xf32>,
    } else {
    }
    return
  }
  func.func @transform_0(%arg0: i32, %arg1: i32, %arg2: i32) -> (i32, i32) {
    %c0_i32 = arith.constant 0 : i32
    return %arg0, %arg2 : i32, i32
  }
  func.func @transform_1(%arg0: i32, %arg1: i32, %arg2: i32) -> (i32, i32) {
    %c0_i32 = arith.constant 0 : i32
    return %arg1, %arg2 : i32, i32
  }
  func.func @transform_2(%arg0: i32, %arg1: i32, %arg2: i32) -> (i32, i32) {
    %c0_i32 = arith.constant 0 : i32
    return %arg0, %arg1 : i32, i32
  }
}

</mosaic_0001>

<llo_original>
// kernel: tpu_custom_call.1
$region0: #{tpu_custom_call.1}
  #allocation0 [shape = 'u32[]', space=smem, size = 0x4, offset = 0x4, fixed_abs, tag = 'smem constant byte address 0x4 - core index']
  #allocation1 [shape = 'u32[72,128]{1,0:T(1,128)}', space=vmem, size = 0x9000, scoped, tag = 'internal scratch']
  #allocation2 [shape = 'f32[128,512]{1,0:T(8,128)}', space=vmem, size = 0x40000, scoped, tag = 'scratch operand']
  %s0 = inlined_call_operand.hbm [shape: f32[128,256], index: 0, kind: input, shape index: {}]
  %s1 = inlined_call_operand.hbm [shape: f32[1024,256], index: 1, kind: input, shape index: {}]
  %s2 = inlined_call_operand.hbm [shape: f32[128,1024], index: 2, kind: output, shape index: {}]
  %s3 = sld [smem:[#allocation0]]
  $region57: #{tpu_custom_call.1} parent=0
    _
  %s5 = ssub.s32 1, %s3
  %s6 = scalar_select 0, %s5, %s3
  $region1: #{tpu_custom_call.1} parent=0
    #allocation3 [shape = 'u8[131072]{0}', space=vmem, size = 0x20000, scoped, tag = 'input window, operand 0']
    #allocation4 [shape = 's32[2]{0}', space=sflag, size = 0x8, scoped, tag = 'scoped memory for tpu_custom_call.1']
    #allocation5 [shape = 's32[2]{0}', space=sflag, size = 0x8, scoped, tag = 'scoped memory for tpu_custom_call.1']
    #allocation6 [shape = 'u8[524288]{0}', space=vmem, size = 0x80000, scoped, tag = 'input window, operand 1']
    #allocation7 [shape = 's32[2]{0}', space=sflag, size = 0x8, scoped, tag = 'scoped memory for tpu_custom_call.1']
    #allocation8 [shape = 'u8[524288]{0}', space=vmem, size = 0x80000, scoped, tag = 'output window, operand 0']
    %7 = vsyncpa [#allocation4], 0
    %s8 = scalar_lea.sflag [#allocation4], 1
    %9 = vsyncpa %s8, 0
    %10 = vsyncpa [#allocation7], 0
    %s11 = scalar_lea.sflag [#allocation7], 1
    %12 = vsyncpa %s11, 0
    %13 = vsyncpa [#allocation5], 0
    %s14 = scalar_lea.sflag [#allocation5], 1
    %15 = vsyncpa %s14, 0
    loop: start=0, step=1, limit=6
    $region2: #{tpu_custom_call.1} parent=1 // loop_pre_header
      _
    $region3: #{tpu_custom_call.1} parent=1 // loop_header
      %s17 = sphi 0, %s21
      %p18 = scmp.ge.s32.totalorder %s17, 6
      %s24 = sphi 0, %s43
      %s25 = sphi 0, %s39
      %s26 = sphi 0, %s35
      %s27 = sphi 0, %s24
      %s28 = sphi 0, %s25
      %s29 = sphi 0, %s26
      %s30 = sphi 0, %s27
      %s31 = sphi 0, %s28
      %s32 = sphi 0, %s29
      %s48 = sphi 0, %s50
      %s51 = sphi 0, %s48
      %s52 = sphi 0, %s51
      %s68 = sphi 0, %s52
      %s76 = sphi 0, %s78
      %s79 = sphi 0, %s76
      %s80 = sphi 0, %s79
      %s96 = sphi 0, %s80
      %s104 = sphi 0, %s106
      %s107 = sphi 0, %s104
      %s108 = sphi 0, %s107
      %s124 = sphi 0, %s108
    $region4: #{tpu_custom_call.1} parent=1 // loop_header_branch
      %20 = sbr.rel (%p18) target = $region8
    $region5: #{tpu_custom_call.1} parent=1 // loop_body
      %s22 = ssub.s32 %s17, 1
      %s23 = ssub.s32 %s17, 2
      %s33 = sadd.s32 1, %s26
      %p34 = scmp.ge.s32.totalorder %s33, 2
      %s35 = scalar_select %p34, 0, %s33
      %s36 = sadd.s32 1, %s25
      %s37 = scalar_select %p34, %s36, %s25
      %p38 = scmp.ge.s32.totalorder %s37, 2
      %s39 = scalar_select %p38, 0, %s37
      %s40 = sadd.s32 1, %s24
      %s41 = scalar_select %p38, %s40, %s24
      %p42 = scmp.ge.s32.totalorder %s41, 1
      %s43 = scalar_select %p42, 0, %s41
      %s44 = ssub.s32 %s24, %s43
      %s45 = ssub.s32 %s26, %s35
      %s46 = sor.u32 %s44, %s45
      %p47 = scmp.eq.s32.totalorder %s46, 0
      %s49 = sadd.s32 %s48, 1
      %s50 = scalar_select %p47, %s48, %s49
      %p53 = pneg %p47
      %p54 = scmp.eq.s32.totalorder %s17, 3
      %p55 = por %p53, %p54
      %p56 = scmp.ne.s32.totalorder %s48, %s51
      %p57 = scmp.eq.s32.totalorder %s17, 0
      %p58 = por %p56, %p57
      %p59 = scmp.ne.s32.totalorder %s48, %s51
      %p60 = scmp.eq.s32.totalorder %s22, 3
      %p61 = por %p59, %p60
      %p62 = scmp.ne.s32.totalorder %s51, %s52
      %p63 = scmp.eq.s32.totalorder %s22, 0
      %p64 = por %p62, %p63
      %p65 = scmp.ne.s32.totalorder %s51, %s52
      %p66 = scmp.eq.s32.totalorder %s23, 3
      %p67 = por %p65, %p66
      %p69 = scmp.ne.s32.totalorder %s52, %s68
      %p70 = scmp.eq.s32.totalorder %s23, 0
      %p71 = por %p69, %p70
      %s72 = ssub.s32 %s25, %s39
      %s73 = ssub.s32 %s26, %s35
      %s74 = sor.u32 %s72, %s73
      %p75 = scmp.eq.s32.totalorder %s74, 0
      %s77 = sadd.s32 %s76, 1
      %s78 = scalar_select %p75, %s76, %s77
      %p81 = pneg %p75
      %p82 = scmp.eq.s32.totalorder %s17, 3
      %p83 = por %p81, %p82
      %p84 = scmp.ne.s32.totalorder %s76, %s79
      %p85 = scmp.eq.s32.totalorder %s17, 0
      %p86 = por %p84, %p85
      %p87 = scmp.ne.s32.totalorder %s76, %s79
      %p88 = scmp.eq.s32.totalorder %s22, 3
      %p89 = por %p87, %p88
      %p90 = scmp.ne.s32.totalorder %s79, %s80
      %p91 = scmp.eq.s32.totalorder %s22, 0
      %p92 = por %p90, %p91
      %p93 = scmp.ne.s32.totalorder %s79, %s80
      %p94 = scmp.eq.s32.totalorder %s23, 3
      %p95 = por %p93, %p94
      %p97 = scmp.ne.s32.totalorder %s80, %s96
      %p98 = scmp.eq.s32.totalorder %s23, 0
      %p99 = por %p97, %p98
      %s100 = ssub.s32 %s24, %s43
      %s101 = ssub.s32 %s25, %s39
      %s102 = sor.u32 %s100, %s101
      %p103 = scmp.eq.s32.totalorder %s102, 0
      %s105 = sadd.s32 %s104, 1
      %s106 = scalar_select %p103, %s104, %s105
      %p109 = pneg %p103
      %p110 = scmp.eq.s32.totalorder %s17, 3
      %p111 = por %p109, %p110
      %p112 = scmp.ne.s32.totalorder %s104, %s107
      %p113 = scmp.eq.s32.totalorder %s17, 0
      %p114 = por %p112, %p113
      %p115 = scmp.ne.s32.totalorder %s104, %s107
      %p116 = scmp.eq.s32.totalorder %s22, 3
      %p117 = por %p115, %p116
      %p118 = scmp.ne.s32.totalorder %s107, %s108
      %p119 = scmp.eq.s32.totalorder %s22, 0
      %p120 = por %p118, %p119
      %p121 = scmp.ne.s32.totalorder %s107, %s108
      %p122 = scmp.eq.s32.totalorder %s23, 3
      %p123 = por %p121, %p122
      %p125 = scmp.ne.s32.totalorder %s108, %s124
      %p126 = scmp.eq.s32.totalorder %s23, 0
      %p127 = por %p125, %p126
      %p128 = scmp.le.s32.totalorder 1, %s17
      %p129 = scmp.lt.s32.totalorder %s17, 5
      %p130 = pnand %p128, %p129
      %p131 = pneg %p130
      // Predicated region
      $region9: #{tpu_custom_call.1} parent=5 // pred_check
        _
      $region10: #{tpu_custom_call.1} parent=5 // pred_check_branch
        %133 = sbr.rel (%p130) target = $region12
      $region11: #{tpu_custom_call.1} parent=5 // pred_region
        %s134 = ssub.s32 %s17, 1
      $region12: #{tpu_custom_call.1} parent=5 // pred_fallthru
        _
      %p135 = scmp.lt.s32.totalorder %s17, 4
      // Predicated region
      $region13: #{tpu_custom_call.1} parent=5 // pred_check
        %p136 = pneg %p135
      $region14: #{tpu_custom_call.1} parent=5 // pred_check_branch
        %138 = sbr.rel (%p136) target = $region16
      $region15: #{tpu_custom_call.1} parent=5 // pred_region
        // Predicated region
        $region17: #{tpu_custom_call.1} parent=15 // pred_check
          %p139 = pneg %p58
        $region18: #{tpu_custom_call.1} parent=15 // pred_check_branch
          %141 = sbr.rel (%p139) target = $region20
        $region19: #{tpu_custom_call.1} parent=15 // pred_region
          %s142 = sand.u32 %s48, 1
          %s143 = scalar_lea.sflag [#allocation4], %s142
          %s144 = sand.u32 %s48, 1
          %s145 = smul.addr %s144, 128
          %s146 = scalar_lea.vmem [#allocation3], %s145
          %s147 = smul.u32 16, %s24
          %149 = vsyncadd %s143, 0
          %s150 = smul.addr %s147, 2
          %s151 = sadd.s32 %s26, %s150
          %s152 = smul.addr %s151, 8
          %s153 = scalar_lea.hbm %s0, %s152
          %s154 = sshll.u32 %s153, 4
          %s155 = int_to_ptr.hbm [resolvable:$true] %s154
          %s156 = sshll.u32 %s146, 4
          %s157 = int_to_ptr.vmem [resolvable:$true] %s156
          %162 = dma.hbm_to_vmem [thread:$0]  %s155, 2048, %s157, %s143, 256, 128, 8
        $region20: #{tpu_custom_call.1} parent=15 // pred_fallthru
          _
        // Predicated region
        $region21: #{tpu_custom_call.1} parent=15 // pred_check
          %p163 = pneg %p86
        $region22: #{tpu_custom_call.1} parent=15 // pred_check_branch
          %165 = sbr.rel (%p163) target = $region24
        $region23: #{tpu_custom_call.1} parent=15 // pred_region
          %s166 = sand.u32 %s76, 1
          %s167 = scalar_lea.sflag [#allocation7], %s166
          %s168 = sand.u32 %s76, 1
          %s169 = smul.addr %s168, 512
          %s170 = scalar_lea.vmem [#allocation6], %s169
          %s171 = smul.u32 64, %s25
          %173 = vsyncadd %s167, 0
          %s174 = smul.addr %s171, 2
          %s175 = sadd.s32 %s26, %s174
          %s176 = smul.addr %s175, 8
          %s177 = scalar_lea.hbm %s1, %s176
          %s178 = sshll.u32 %s177, 4
          %s179 = int_to_ptr.hbm [resolvable:$true] %s178
          %s180 = sshll.u32 %s170, 4
          %s181 = int_to_ptr.vmem [resolvable:$true] %s180
          %186 = dma.hbm_to_vmem [thread:$0]  %s179, 8192, %s181, %s167, 256, 128, 8
        $region24: #{tpu_custom_call.1} parent=15 // pred_fallthru
          _
      $region16: #{tpu_custom_call.1} parent=5 // pred_fallthru
        _
      %p187 = scmp.le.s32.totalorder 1, %s17
      %p188 = scmp.lt.s32.totalorder %s17, 5
      %p189 = pnand %p187, %p188
      %p190 = pneg %p189
      // Predicated region
      $region25: #{tpu_custom_call.1} parent=5 // pred_check
        _
      $region26: #{tpu_custom_call.1} parent=5 // pred_check_branch
        %192 = sbr.rel (%p189) target = $region28
      $region27: #{tpu_custom_call.1} parent=5 // pred_region
        %s193 = ssub.s32 %s17, 1
        %s194 = sand.u32 %s51, 1
        %s195 = scalar_lea.sflag [#allocation4], %s194
        %s196 = sand.u32 %s51, 1
        %s197 = smul.addr %s196, 128
        %s198 = scalar_lea.vmem [#allocation3], %s197
        // Predicated region
        $region29: #{tpu_custom_call.1} parent=27 // pred_check
          %p199 = pneg %p64
        $region30: #{tpu_custom_call.1} parent=27 // pred_check_branch
          %201 = sbr.rel (%p199) target = $region32
        $region31: #{tpu_custom_call.1} parent=27 // pred_region
          %203 = dma.done %s195, 2048
        $region32: #{tpu_custom_call.1} parent=27 // pred_fallthru
          _
        %s204 = sand.u32 %s79, 1
        %s205 = scalar_lea.sflag [#allocation7], %s204
        %s206 = sand.u32 %s79, 1
        %s207 = smul.addr %s206, 512
        %s208 = scalar_lea.vmem [#allocation6], %s207
        // Predicated region
        $region33: #{tpu_custom_call.1} parent=27 // pred_check
          %p209 = pneg %p92
        $region34: #{tpu_custom_call.1} parent=27 // pred_check_branch
          %211 = sbr.rel (%p209) target = $region36
        $region35: #{tpu_custom_call.1} parent=27 // pred_region
          %213 = dma.done %s205, 8192
        $region36: #{tpu_custom_call.1} parent=27 // pred_fallthru
          _
        %s214 = sand.u32 %s51, 1
        %s215 = scalar_lea.sflag [#allocation4], %s214
        %s216 = sand.u32 %s51, 1
        %s217 = smul.addr %s216, 128
        %s218 = scalar_lea.vmem [#allocation3], %s217
        %p219 = pneg %p64
        %p220 = pneg %p61
        %s221 = sand.u32 %s79, 1
        %s222 = scalar_lea.sflag [#allocation7], %s221
        %s223 = sand.u32 %s79, 1
        %s224 = smul.addr %s223, 512
        %s225 = scalar_lea.vmem [#allocation6], %s224
        %p226 = pneg %p92
        %p227 = pneg %p89
        %p228 = pneg %p120
        %p229 = pneg %p117
        %s230 = sand.u32 %s107, 1
        %s231 = scalar_lea.sflag [#allocation5], %s230
        %s232 = sand.u32 %s107, 1
        %s233 = smul.addr %s232, 512
        %s234 = scalar_lea.vmem [#allocation8], %s233
        %s235 = smul.u32 16, %s27
        %s236 = smul.u32 64, %s28
        %s237 = smul.u32 16, %s27
        %s238 = smul.u32 4, %s28
        %p239 = scmp.eq.s32.totalorder %s29, 0
        // Predicated region
        $region37: #{tpu_custom_call.1} parent=27 // pred_check
          %p240 = pneg %p239
        $region38: #{tpu_custom_call.1} parent=27 // pred_check_branch
          %242 = sbr.rel (%p240) target = $region40
        $region39: #{tpu_custom_call.1} parent=27 // pred_region
          %243 = vst [vmem:[#allocation2] sm:$0xff] 0.0
          %244 = vst [vmem:[#allocation2 + $0x8] sm:$0xff] 0.0
          %245 = vst [vmem:[#allocation2 + $0x10] sm:$0xff] 0.0
          %246 = vst [vmem:[#allocation2 + $0x18] sm:$0xff] 0.0
          %247 = vst [vmem:[#allocation2 + $0x20] sm:$0xff] 0.0
          %248 = vst [vmem:[#allocation2 + $0x28] sm:$0xff] 0.0
          %249 = vst [vmem:[#allocation2 + $0x30] sm:$0xff] 0.0
          %250 = vst [vmem:[#allocation2 + $0x38] sm:$0xff] 0.0
          %251 = vst [vmem:[#allocation2 + $0x40] sm:$0xff] 0.0
          %252 = vst [vmem:[#allocation2 + $0x48] sm:$0xff] 0.0
          %253 = vst [vmem:[#allocation2 + $0x50] sm:$0xff] 0.0
          %254 = vst [vmem:[#allocation2 + $0x58] sm:$0xff] 0.0
          %255 = vst [vmem:[#allocation2 + $0x60] sm:$0xff] 0.0
          %256 = vst [vmem:[#allocation2 + $0x68] sm:$0xff] 0.0
          %257 = vst [vmem:[#allocation2 + $0x70] sm:$0xff] 0.0
          %258 = vst [vmem:[#allocation2 + $0x78] sm:$0xff] 0.0
          %259 = vst [vmem:[#allocation2 + $0x80] sm:$0xff] 0.0
          %260 = vst [vmem:[#allocation2 + $0x88] sm:$0xff] 0.0
          %261 = vst [vmem:[#allocation2 + $0x90] sm:$0xff] 0.0
          %262 = vst [vmem:[#allocation2 + $0x98] sm:$0xff] 0.0
          %263 = vst [vmem:[#allocation2 + $0xa0] sm:$0xff] 0.0
          %264 = vst [vmem:[#allocation2 + $0xa8] sm:$0xff] 0.0
          %265 = vst [vmem:[#allocation2 + $0xb0] sm:$0xff] 0.0
          %266 = vst [vmem:[#allocation2 + $0xb8] sm:$0xff] 0.0
          %267 = vst [vmem:[#allocation2 + $0xc0] sm:$0xff] 0.0
          %268 = vst [vmem:[#allocation2 + $0xc8] sm:$0xff] 0.0
          %269 = vst [vmem:[#allocation2 + $0xd0] sm:$0xff] 0.0
          %270 = vst [vmem:[#allocation2 + $0xd8] sm:$0xff] 0.0
          %271 = vst [vmem:[#allocation2 + $0xe0] sm:$0xff] 0.0
          %272 = vst [vmem:[#allocation2 + $0xe8] sm:$0xff] 0.0
          %273 = vst [vmem:[#allocation2 + $0xf0] sm:$0xff] 0.0
          %274 = vst [vmem:[#allocation2 + $0xf8] sm:$0xff] 0.0
          %275 = vst [vmem:[#allocation2 + $0x100] sm:$0xff] 0.0
          %276 = vst [vmem:[#allocation2 + $0x108] sm:$0xff] 0.0
          %277 = vst [vmem:[#allocation2 + $0x110] sm:$0xff] 0.0
          %278 = vst [vmem:[#allocation2 + $0x118] sm:$0xff] 0.0
          %279 = vst [vmem:[#allocation2 + $0x120] sm:$0xff] 0.0
          %280 = vst [vmem:[#allocation2 + $0x128] sm:$0xff] 0.0
          %281 = vst [vmem:[#allocation2 + $0x130] sm:$0xff] 0.0
          %282 = vst [vmem:[#allocation2 + $0x138] sm:$0xff] 0.0
          %283 = vst [vmem:[#allocation2 + $0x140] sm:$0xff] 0.0
          %284 = vst [vmem:[#allocation2 + $0x148] sm:$0xff] 0.0
          %285 = vst [vmem:[#allocation2 + $0x150] sm:$0xff] 0.0
          %286 = vst [vmem:[#allocation2 + $0x158] sm:$0xff] 0.0
          %287 = vst [vmem:[#allocation2 + $0x160] sm:$0xff] 0.0
          %288 = vst [vmem:[#allocation2 + $0x168] sm:$0xff] 0.0
          %289 = vst [vmem:[#allocation2 + $0x170] sm:$0xff] 0.0
          %290 = vst [vmem:[#allocation2 + $0x178] sm:$0xff] 0.0
          %291 = vst [vmem:[#allocation2 + $0x180] sm:$0xff] 0.0
          %292 = vst [vmem:[#allocation2 + $0x188] sm:$0xff] 0.0
          %293 = vst [vmem:[#allocation2 + $0x190] sm:$0xff] 0.0
          %294 = vst [vmem:[#allocation2 + $0x198] sm:$0xff] 0.0
          %295 = vst [vmem:[#allocation2 + $0x1a0] sm:$0xff] 0.0
          %296 = vst [vmem:[#allocation2 + $0x1a8] sm:$0xff] 0.0
          %297 = vst [vmem:[#allocation2 + $0x1b0] sm:$0xff] 0.0
          %298 = vst [vmem:[#allocation2 + $0x1b8] sm:$0xff] 0.0
          %299 = vst [vmem:[#allocation2 + $0x1c0] sm:$0xff] 0.0
          %300 = vst [vmem:[#allocation2 + $0x1c8] sm:$0xff] 0.0
          %301 = vst [vmem:[#allocation2 + $0x1d0] sm:$0xff] 0.0
          %302 = vst [vmem:[#allocation2 + $0x1d8] sm:$0xff] 0.0
          %303 = vst [vmem:[#allocation2 + $0x1e0] sm:$0xff] 0.0
          %304 = vst [vmem:[#allocation2 + $0x1e8] sm:$0xff] 0.0
          %305 = vst [vmem:[#allocation2 + $0x1f0] sm:$0xff] 0.0
          %306 = vst [vmem:[#allocation2 + $0x1f8] sm:$0xff] 0.0
        $region40: #{tpu_custom_call.1} parent=27 // pred_fallthru
          _
        %v307 = vld [vmem:[#allocation2] sm:$0xff]
        %v308 = vld [vmem:[#allocation2 + $0x8] sm:$0xff]
        %v309 = vld [vmem:[#allocation2 + $0x10] sm:$0xff]
        %v310 = vld [vmem:[#allocation2 + $0x18] sm:$0xff]
        %v311 = vld [vmem:[#allocation2 + $0x20] sm:$0xff]
        %v312 = vld [vmem:[#allocation2 + $0x28] sm:$0xff]
        %v313 = vld [vmem:[#allocation2 + $0x30] sm:$0xff]
        %v314 = vld [vmem:[#allocation2 + $0x38] sm:$0xff]
        %v315 = vld [vmem:[#allocation2 + $0x40] sm:$0xff]
        %v316 = vld [vmem:[#allocation2 + $0x48] sm:$0xff]
        %v317 = vld [vmem:[#allocation2 + $0x50] sm:$0xff]
        %v318 = vld [vmem:[#allocation2 + $0x58] sm:$0xff]
        %v319 = vld [vmem:[#allocation2 + $0x60] sm:$0xff]
        %v320 = vld [vmem:[#allocation2 + $0x68] sm:$0xff]
        %v321 = vld [vmem:[#allocation2 + $0x70] sm:$0xff]
        %v322 = vld [vmem:[#allocation2 + $0x78] sm:$0xff]
        %v323 = vld [vmem:[#allocation2 + $0x80] sm:$0xff]
        %v324 = vld [vmem:[#allocation2 + $0x88] sm:$0xff]
        %v325 = vld [vmem:[#allocation2 + $0x90] sm:$0xff]
        %v326 = vld [vmem:[#allocation2 + $0x98] sm:$0xff]
        %v327 = vld [vmem:[#allocation2 + $0xa0] sm:$0xff]
        %v328 = vld [vmem:[#allocation2 + $0xa8] sm:$0xff]
        %v329 = vld [vmem:[#allocation2 + $0xb0] sm:$0xff]
        %v330 = vld [vmem:[#allocation2 + $0xb8] sm:$0xff]
        %v331 = vld [vmem:[#allocation2 + $0xc0] sm:$0xff]
        %v332 = vld [vmem:[#allocation2 + $0xc8] sm:$0xff]
        %v333 = vld [vmem:[#allocation2 + $0xd0] sm:$0xff]
        %v334 = vld [vmem:[#allocation2 + $0xd8] sm:$0xff]
        %v335 = vld [vmem:[#allocation2 + $0xe0] sm:$0xff]
        %v336 = vld [vmem:[#allocation2 + $0xe8] sm:$0xff]
        %v337 = vld [vmem:[#allocation2 + $0xf0] sm:$0xff]
        %v338 = vld [vmem:[#allocation2 + $0xf8] sm:$0xff]
        %v339 = vld [vmem:[#allocation2 + $0x100] sm:$0xff]
        %v340 = vld [vmem:[#allocation2 + $0x108] sm:$0xff]
        %v341 = vld [vmem:[#allocation2 + $0x110] sm:$0xff]
        %v342 = vld [vmem:[#allocation2 + $0x118] sm:$0xff]
        %v343 = vld [vmem:[#allocation2 + $0x120] sm:$0xff]
        %v344 = vld [vmem:[#allocation2 + $0x128] sm:$0xff]
        %v345 = vld [vmem:[#allocation2 + $0x130] sm:$0xff]
        %v346 = vld [vmem:[#allocation2 + $0x138] sm:$0xff]
        %v347 = vld [vmem:[#allocation2 + $0x140] sm:$0xff]
        %v348 = vld [vmem:[#allocation2 + $0x148] sm:$0xff]
        %v349 = vld [vmem:[#allocation2 + $0x150] sm:$0xff]
        %v350 = vld [vmem:[#allocation2 + $0x158] sm:$0xff]
        %v351 = vld [vmem:[#allocation2 + $0x160] sm:$0xff]
        %v352 = vld [vmem:[#allocation2 + $0x168] sm:$0xff]
        %v353 = vld [vmem:[#allocation2 + $0x170] sm:$0xff]
        %v354 = vld [vmem:[#allocation2 + $0x178] sm:$0xff]
        %v355 = vld [vmem:[#allocation2 + $0x180] sm:$0xff]
        %v356 = vld [vmem:[#allocation2 + $0x188] sm:$0xff]
        %v357 = vld [vmem:[#allocation2 + $0x190] sm:$0xff]
        %v358 = vld [vmem:[#allocation2 + $0x198] sm:$0xff]
        %v359 = vld [vmem:[#allocation2 + $0x1a0] sm:$0xff]
        %v360 = vld [vmem:[#allocation2 + $0x1a8] sm:$0xff]
        %v361 = vld [vmem:[#allocation2 + $0x1b0] sm:$0xff]
        %v362 = vld [vmem:[#allocation2 + $0x1b8] sm:$0xff]
        %v363 = vld [vmem:[#allocation2 + $0x1c0] sm:$0xff]
        %v364 = vld [vmem:[#allocation2 + $0x1c8] sm:$0xff]
        %v365 = vld [vmem:[#allocation2 + $0x1d0] sm:$0xff]
        %v366 = vld [vmem:[#allocation2 + $0x1d8] sm:$0xff]
        %v367 = vld [vmem:[#allocation2 + $0x1e0] sm:$0xff]
        %v368 = vld [vmem:[#allocation2 + $0x1e8] sm:$0xff]
        %v369 = vld [vmem:[#allocation2 + $0x1f0] sm:$0xff]
        %v370 = vld [vmem:[#allocation2 + $0x1f8] sm:$0xff]
        %v371 = vld [vmem:[%s198] sm:$0xff]
        %v372 = vld [vmem:[%s198 + $0x8] sm:$0xff]
        %v373 = vld [vmem:[%s198 + $0x10] sm:$0xff]
        %v374 = vld [vmem:[%s198 + $0x18] sm:$0xff]
        %v375 = vld [vmem:[%s198 + $0x20] sm:$0xff]
        %v376 = vld [vmem:[%s198 + $0x28] sm:$0xff]
        %v377 = vld [vmem:[%s198 + $0x30] sm:$0xff]
        %v378 = vld [vmem:[%s198 + $0x38] sm:$0xff]
        %v379 = vld [vmem:[%s198 + $0x40] sm:$0xff]
        %v380 = vld [vmem:[%s198 + $0x48] sm:$0xff]
        %v381 = vld [vmem:[%s198 + $0x50] sm:$0xff]
        %v382 = vld [vmem:[%s198 + $0x58] sm:$0xff]
        %v383 = vld [vmem:[%s198 + $0x60] sm:$0xff]
        %v384 = vld [vmem:[%s198 + $0x68] sm:$0xff]
        %v385 = vld [vmem:[%s198 + $0x70] sm:$0xff]
        %v386 = vld [vmem:[%s198 + $0x78] sm:$0xff]
        %v387 = vld [vmem:[%s208] sm:$0xff]
        %v388 = vld [vmem:[%s208 + $0x8] sm:$0xff]
        %v389 = vld [vmem:[%s208 + $0x10] sm:$0xff]
        %v390 = vld [vmem:[%s208 + $0x18] sm:$0xff]
        %v391 = vld [vmem:[%s208 + $0x20] sm:$0xff]
        %v392 = vld [vmem:[%s208 + $0x28] sm:$0xff]
        %v393 = vld [vmem:[%s208 + $0x30] sm:$0xff]
        %v394 = vld [vmem:[%s208 + $0x38] sm:$0xff]
        %v395 = vld [vmem:[%s208 + $0x40] sm:$0xff]
        %v396 = vld [vmem:[%s208 + $0x48] sm:$0xff]
        %v397 = vld [vmem:[%s208 + $0x50] sm:$0xff]
        %v398 = vld [vmem:[%s208 + $0x58] sm:$0xff]
        %v399 = vld [vmem:[%s208 + $0x60] sm:$0xff]
        %v400 = vld [vmem:[%s208 + $0x68] sm:$0xff]
        %v401 = vld [vmem:[%s208 + $0x70] sm:$0xff]
        %v402 = vld [vmem:[%s208 + $0x78] sm:$0xff]
        %v403 = vld [vmem:[%s208 + $0x80] sm:$0xff]
        %v404 = vld [vmem:[%s208 + $0x88] sm:$0xff]
        %v405 = vld [vmem:[%s208 + $0x90] sm:$0xff]
        %v406 = vld [vmem:[%s208 + $0x98] sm:$0xff]
        %v407 = vld [vmem:[%s208 + $0xa0] sm:$0xff]
        %v408 = vld [vmem:[%s208 + $0xa8] sm:$0xff]
        %v409 = vld [vmem:[%s208 + $0xb0] sm:$0xff]
        %v410 = vld [vmem:[%s208 + $0xb8] sm:$0xff]
        %v411 = vld [vmem:[%s208 + $0xc0] sm:$0xff]
        %v412 = vld [vmem:[%s208 + $0xc8] sm:$0xff]
        %v413 = vld [vmem:[%s208 + $0xd0] sm:$0xff]
        %v414 = vld [vmem:[%s208 + $0xd8] sm:$0xff]
        %v415 = vld [vmem:[%s208 + $0xe0] sm:$0xff]
        %v416 = vld [vmem:[%s208 + $0xe8] sm:$0xff]
        %v417 = vld [vmem:[%s208 + $0xf0] sm:$0xff]
        %v418 = vld [vmem:[%s208 + $0xf8] sm:$0xff]
        %v419 = vld [vmem:[%s208 + $0x100] sm:$0xff]
        %v420 = vld [vmem:[%s208 + $0x108] sm:$0xff]
        %v421 = vld [vmem:[%s208 + $0x110] sm:$0xff]
        %v422 = vld [vmem:[%s208 + $0x118] sm:$0xff]
        %v423 = vld [vmem:[%s208 + $0x120] sm:$0xff]
        %v424 = vld [vmem:[%s208 + $0x128] sm:$0xff]
        %v425 = vld [vmem:[%s208 + $0x130] sm:$0xff]
        %v426 = vld [vmem:[%s208 + $0x138] sm:$0xff]
        %v427 = vld [vmem:[%s208 + $0x140] sm:$0xff]
        %v428 = vld [vmem:[%s208 + $0x148] sm:$0xff]
        %v429 = vld [vmem:[%s208 + $0x150] sm:$0xff]
        %v430 = vld [vmem:[%s208 + $0x158] sm:$0xff]
        %v431 = vld [vmem:[%s208 + $0x160] sm:$0xff]
        %v432 = vld [vmem:[%s208 + $0x168] sm:$0xff]
        %v433 = vld [vmem:[%s208 + $0x170] sm:$0xff]
        %v434 = vld [vmem:[%s208 + $0x178] sm:$0xff]
        %v435 = vld [vmem:[%s208 + $0x180] sm:$0xff]
        %v436 = vld [vmem:[%s208 + $0x188] sm:$0xff]
        %v437 = vld [vmem:[%s208 + $0x190] sm:$0xff]
        %v438 = vld [vmem:[%s208 + $0x198] sm:$0xff]
        %v439 = vld [vmem:[%s208 + $0x1a0] sm:$0xff]
        %v440 = vld [vmem:[%s208 + $0x1a8] sm:$0xff]
        %v441 = vld [vmem:[%s208 + $0x1b0] sm:$0xff]
        %v442 = vld [vmem:[%s208 + $0x1b8] sm:$0xff]
        %v443 = vld [vmem:[%s208 + $0x1c0] sm:$0xff]
        %v444 = vld [vmem:[%s208 + $0x1c8] sm:$0xff]
        %v445 = vld [vmem:[%s208 + $0x1d0] sm:$0xff]
        %v446 = vld [vmem:[%s208 + $0x1d8] sm:$0xff]
        %v447 = vld [vmem:[%s208 + $0x1e0] sm:$0xff]
        %v448 = vld [vmem:[%s208 + $0x1e8] sm:$0xff]
        %v449 = vld [vmem:[%s208 + $0x1f0] sm:$0xff]
        %v450 = vld [vmem:[%s208 + $0x1f8] sm:$0xff]
        %451 = vmatpush.xpose.msra.mxu0 %v402
        %452 = vmatpush.xpose.msra.mxu0 %v401
        %453 = vmatpush.xpose.msra.mxu0 %v400
        %454 = vmatpush.xpose.msra.mxu0 %v399
        %455 = vmatpush.xpose.msra.mxu0 %v398
        %456 = vmatpush.xpose.msra.mxu0 %v397
        %457 = vmatpush.xpose.msra.mxu0 %v396
        %458 = vmatpush.xpose.msra.mxu0 %v395
        %459 = vmatpush.xpose.msra.mxu0 %v394
        %460 = vmatpush.xpose.msra.mxu0 %v393
        %461 = vmatpush.xpose.msra.mxu0 %v392
        %462 = vmatpush.xpose.msra.mxu0 %v391
        %463 = vmatpush.xpose.msra.mxu0 %v390
        %464 = vmatpush.xpose.msra.mxu0 %v389
        %465 = vmatpush.xpose.msra.mxu0 %v388
        %466 = vmatpush.xpose.msra.mxu0 %v387
        %467 = vmatmul.f32.gmra.mxu0 %v371
        %v468 = vpop.f32.mrf.mxu0
        %v469 = vadd.f32 0.0, %v468
        %470 = vmatmul.f32.gmra.mxu0 %v372
        %v471 = vpop.f32.mrf.mxu0
        %v472 = vadd.f32 0.0, %v471
        %473 = vmatmul.f32.gmra.mxu0 %v373
        %v474 = vpop.f32.mrf.mxu0
        %v475 = vadd.f32 0.0, %v474
        %476 = vmatmul.f32.gmra.mxu0 %v374
        %v477 = vpop.f32.mrf.mxu0
        %v478 = vadd.f32 0.0, %v477
        %479 = vmatmul.f32.gmra.mxu0 %v375
        %v480 = vpop.f32.mrf.mxu0
        %v481 = vadd.f32 0.0, %v480
        %482 = vmatmul.f32.gmra.mxu0 %v376
        %v483 = vpop.f32.mrf.mxu0
        %v484 = vadd.f32 0.0, %v483
        %485 = vmatmul.f32.gmra.mxu0 %v377
        %v486 = vpop.f32.mrf.mxu0
        %v487 = vadd.f32 0.0, %v486
        %488 = vmatmul.f32.gmra.mxu0 %v378
        %v489 = vpop.f32.mrf.mxu0
        %v490 = vadd.f32 0.0, %v489
        %491 = vmatmul.f32.gmra.mxu0 %v379
        %v492 = vpop.f32.mrf.mxu0
        %v493 = vadd.f32 0.0, %v492
        %494 = vmatmul.f32.gmra.mxu0 %v380
        %v495 = vpop.f32.mrf.mxu0
        %v496 = vadd.f32 0.0, %v495
        %497 = vmatmul.f32.gmra.mxu0 %v381
        %v498 = vpop.f32.mrf.mxu0
        %v499 = vadd.f32 0.0, %v498
        %500 = vmatmul.f32.gmra.mxu0 %v382
        %v501 = vpop.f32.mrf.mxu0
        %v502 = vadd.f32 0.0, %v501
        %503 = vmatmul.f32.gmra.mxu0 %v383
        %v504 = vpop.f32.mrf.mxu0
        %v505 = vadd.f32 0.0, %v504
        %506 = vmatmul.f32.gmra.mxu0 %v384
        %v507 = vpop.f32.mrf.mxu0
        %v508 = vadd.f32 0.0, %v507
        %509 = vmatmul.f32.gmra.mxu0 %v385
        %v510 = vpop.f32.mrf.mxu0
        %v511 = vadd.f32 0.0, %v510
        %512 = vmatmul.f32.gmra.mxu0 %v386
        %v513 = vpop.f32.mrf.mxu0
        %v514 = vadd.f32 0.0, %v513
        %515 = vdwg.mxu0
        %516 = vmatpush.xpose.msra.mxu0 %v418
        %517 = vmatpush.xpose.msra.mxu0 %v417
        %518 = vmatpush.xpose.msra.mxu0 %v416
        %519 = vmatpush.xpose.msra.mxu0 %v415
        %520 = vmatpush.xpose.msra.mxu0 %v414
        %521 = vmatpush.xpose.msra.mxu0 %v413
        %522 = vmatpush.xpose.msra.mxu0 %v412
        %523 = vmatpush.xpose.msra.mxu0 %v411
        %524 = vmatpush.xpose.msra.mxu0 %v410
        %525 = vmatpush.xpose.msra.mxu0 %v409
        %526 = vmatpush.xpose.msra.mxu0 %v408
        %527 = vmatpush.xpose.msra.mxu0 %v407
        %528 = vmatpush.xpose.msra.mxu0 %v406
        %529 = vmatpush.xpose.msra.mxu0 %v405
        %530 = vmatpush.xpose.msra.mxu0 %v404
        %531 = vmatpush.xpose.msra.mxu0 %v403
        %532 = vmatmul.f32.gmra.mxu0 %v371
        %v533 = vpop.f32.mrf.mxu0
        %v534 = vadd.f32 0.0, %v533
        %535 = vmatmul.f32.gmra.mxu0 %v372
        %v536 = vpop.f32.mrf.mxu0
        %v537 = vadd.f32 0.0, %v536
        %538 = vmatmul.f32.gmra.mxu0 %v373
        %v539 = vpop.f32.mrf.mxu0
        %v540 = vadd.f32 0.0, %v539
        %541 = vmatmul.f32.gmra.mxu0 %v374
        %v542 = vpop.f32.mrf.mxu0
        %v543 = vadd.f32 0.0, %v542
        %544 = vmatmul.f32.gmra.mxu0 %v375
        %v545 = vpop.f32.mrf.mxu0
        %v546 = vadd.f32 0.0, %v545
        %547 = vmatmul.f32.gmra.mxu0 %v376
        %v548 = vpop.f32.mrf.mxu0
        %v549 = vadd.f32 0.0, %v548
        %550 = vmatmul.f32.gmra.mxu0 %v377
        %v551 = vpop.f32.mrf.mxu0
        %v552 = vadd.f32 0.0, %v551
        %553 = vmatmul.f32.gmra.mxu0 %v378
        %v554 = vpop.f32.mrf.mxu0
        %v555 = vadd.f32 0.0, %v554
        %556 = vmatmul.f32.gmra.mxu0 %v379
        %v557 = vpop.f32.mrf.mxu0
        %v558 = vadd.f32 0.0, %v557
        %559 = vmatmul.f32.gmra.mxu0 %v380
        %v560 = vpop.f32.mrf.mxu0
        %v561 = vadd.f32 0.0, %v560
        %562 = vmatmul.f32.gmra.mxu0 %v381
        %v563 = vpop.f32.mrf.mxu0
        %v564 = vadd.f32 0.0, %v563
        %565 = vmatmul.f32.gmra.mxu0 %v382
        %v566 = vpop.f32.mrf.mxu0
        %v567 = vadd.f32 0.0, %v566
        %568 = vmatmul.f32.gmra.mxu0 %v383
        %v569 = vpop.f32.mrf.mxu0
        %v570 = vadd.f32 0.0, %v569
        %571 = vmatmul.f32.gmra.mxu0 %v384
        %v572 = vpop.f32.mrf.mxu0
        %v573 = vadd.f32 0.0, %v572
        %574 = vmatmul.f32.gmra.mxu0 %v385
        %v575 = vpop.f32.mrf.mxu0
        %v576 = vadd.f32 0.0, %v575
        %577 = vmatmul.f32.gmra.mxu0 %v386
        %v578 = vpop.f32.mrf.mxu0
        %v579 = vadd.f32 0.0, %v578
        %580 = vdwg.mxu0
        %581 = vmatpush.xpose.msra.mxu0 %v434
        %582 = vmatpush.xpose.msra.mxu0 %v433
        %583 = vmatpush.xpose.msra.mxu0 %v432
        %584 = vmatpush.xpose.msra.mxu0 %v431
        %585 = vmatpush.xpose.msra.mxu0 %v430
        %586 = vmatpush.xpose.msra.mxu0 %v429
        %587 = vmatpush.xpose.msra.mxu0 %v428
        %588 = vmatpush.xpose.msra.mxu0 %v427
        %589 = vmatpush.xpose.msra.mxu0 %v426
        %590 = vmatpush.xpose.msra.mxu0 %v425
        %591 = vmatpush.xpose.msra.mxu0 %v424
        %592 = vmatpush.xpose.msra.mxu0 %v423
        %593 = vmatpush.xpose.msra.mxu0 %v422
        %594 = vmatpush.xpose.msra.mxu0 %v421
        %595 = vmatpush.xpose.msra.mxu0 %v420
        %596 = vmatpush.xpose.msra.mxu0 %v419
        %597 = vmatmul.f32.gmra.mxu0 %v371
        %v598 = vpop.f32.mrf.mxu0
        %v599 = vadd.f32 0.0, %v598
        %600 = vmatmul.f32.gmra.mxu0 %v372
        %v601 = vpop.f32.mrf.mxu0
        %v602 = vadd.f32 0.0, %v601
        %603 = vmatmul.f32.gmra.mxu0 %v373
        %v604 = vpop.f32.mrf.mxu0
        %v605 = vadd.f32 0.0, %v604
        %606 = vmatmul.f32.gmra.mxu0 %v374
        %v607 = vpop.f32.mrf.mxu0
        %v608 = vadd.f32 0.0, %v607
        %609 = vmatmul.f32.gmra.mxu0 %v375
        %v610 = vpop.f32.mrf.mxu0
        %v611 = vadd.f32 0.0, %v610
        %612 = vmatmul.f32.gmra.mxu0 %v376
        %v613 = vpop.f32.mrf.mxu0
        %v614 = vadd.f32 0.0, %v613
        %615 = vmatmul.f32.gmra.mxu0 %v377
        %v616 = vpop.f32.mrf.mxu0
        %v617 = vadd.f32 0.0, %v616
        %618 = vmatmul.f32.gmra.mxu0 %v378
        %v619 = vpop.f32.mrf.mxu0
        %v620 = vadd.f32 0.0, %v619
        %621 = vmatmul.f32.gmra.mxu0 %v379
        %v622 = vpop.f32.mrf.mxu0
        %v623 = vadd.f32 0.0, %v622
        %624 = vmatmul.f32.gmra.mxu0 %v380
        %v625 = vpop.f32.mrf.mxu0
        %v626 = vadd.f32 0.0, %v625
        %627 = vmatmul.f32.gmra.mxu0 %v381
        %v628 = vpop.f32.mrf.mxu0
        %v629 = vadd.f32 0.0, %v628
        %630 = vmatmul.f32.gmra.mxu0 %v382
        %v631 = vpop.f32.mrf.mxu0
        %v632 = vadd.f32 0.0, %v631
        %633 = vmatmul.f32.gmra.mxu0 %v383
        %v634 = vpop.f32.mrf.mxu0
        %v635 = vadd.f32 0.0, %v634
        %636 = vmatmul.f32.gmra.mxu0 %v384
        %v637 = vpop.f32.mrf.mxu0
        %v638 = vadd.f32 0.0, %v637
        %639 = vmatmul.f32.gmra.mxu0 %v385
        %v640 = vpop.f32.mrf.mxu0
        %v641 = vadd.f32 0.0, %v640
        %642 = vmatmul.f32.gmra.mxu0 %v386
        %v643 = vpop.f32.mrf.mxu0
        %v644 = vadd.f32 0.0, %v643
        %645 = vdwg.mxu0
        %646 = vmatpush.xpose.msra.mxu0 %v450
        %647 = vmatpush.xpose.msra.mxu0 %v449
        %648 = vmatpush.xpose.msra.mxu0 %v448
        %649 = vmatpush.xpose.msra.mxu0 %v447
        %650 = vmatpush.xpose.msra.mxu0 %v446
        %651 = vmatpush.xpose.msra.mxu0 %v445
        %652 = vmatpush.xpose.msra.mxu0 %v444
        %653 = vmatpush.xpose.msra.mxu0 %v443
        %654 = vmatpush.xpose.msra.mxu0 %v442
        %655 = vmatpush.xpose.msra.mxu0 %v441
        %656 = vmatpush.xpose.msra.mxu0 %v440
        %657 = vmatpush.xpose.msra.mxu0 %v439
        %658 = vmatpush.xpose.msra.mxu0 %v438
        %659 = vmatpush.xpose.msra.mxu0 %v437
        %660 = vmatpush.xpose.msra.mxu0 %v436
        %661 = vmatpush.xpose.msra.mxu0 %v435
        %662 = vmatmul.f32.gmra.mxu0 %v371
        %v663 = vpop.f32.mrf.mxu0
        %v664 = vadd.f32 0.0, %v663
        %665 = vmatmul.f32.gmra.mxu0 %v372
        %v666 = vpop.f32.mrf.mxu0
        %v667 = vadd.f32 0.0, %v666
        %668 = vmatmul.f32.gmra.mxu0 %v373
        %v669 = vpop.f32.mrf.mxu0
        %v670 = vadd.f32 0.0, %v669
        %671 = vmatmul.f32.gmra.mxu0 %v374
        %v672 = vpop.f32.mrf.mxu0
        %v673 = vadd.f32 0.0, %v672
        %674 = vmatmul.f32.gmra.mxu0 %v375
        %v675 = vpop.f32.mrf.mxu0
        %v676 = vadd.f32 0.0, %v675
        %677 = vmatmul.f32.gmra.mxu0 %v376
        %v678 = vpop.f32.mrf.mxu0
        %v679 = vadd.f32 0.0, %v678
        %680 = vmatmul.f32.gmra.mxu0 %v377
        %v681 = vpop.f32.mrf.mxu0
        %v682 = vadd.f32 0.0, %v681
        %683 = vmatmul.f32.gmra.mxu0 %v378
        %v684 = vpop.f32.mrf.mxu0
        %v685 = vadd.f32 0.0, %v684
        %686 = vmatmul.f32.gmra.mxu0 %v379
        %v687 = vpop.f32.mrf.mxu0
        %v688 = vadd.f32 0.0, %v687
        %689 = vmatmul.f32.gmra.mxu0 %v380
        %v690 = vpop.f32.mrf.mxu0
        %v691 = vadd.f32 0.0, %v690
        %692 = vmatmul.f32.gmra.mxu0 %v381
        %v693 = vpop.f32.mrf.mxu0
        %v694 = vadd.f32 0.0, %v693
        %695 = vmatmul.f32.gmra.mxu0 %v382
        %v696 = vpop.f32.mrf.mxu0
        %v697 = vadd.f32 0.0, %v696
        %698 = vmatmul.f32.gmra.mxu0 %v383
        %v699 = vpop.f32.mrf.mxu0
        %v700 = vadd.f32 0.0, %v699
        %701 = vmatmul.f32.gmra.mxu0 %v384
        %v702 = vpop.f32.mrf.mxu0
        %v703 = vadd.f32 0.0, %v702
        %704 = vmatmul.f32.gmra.mxu0 %v385
        %v705 = vpop.f32.mrf.mxu0
        %v706 = vadd.f32 0.0, %v705
        %707 = vmatmul.f32.gmra.mxu0 %v386
        %v708 = vpop.f32.mrf.mxu0
        %v709 = vadd.f32 0.0, %v708
        %710 = vdwg.mxu0
        %v711 = vadd.f32 %v307, %v469
        %v712 = vadd.f32 %v308, %v534
        %v713 = vadd.f32 %v309, %v599
        %v714 = vadd.f32 %v310, %v664
        %v715 = vadd.f32 %v311, %v472
        %v716 = vadd.f32 %v312, %v537
        %v717 = vadd.f32 %v313, %v602
        %v718 = vadd.f32 %v314, %v667
        %v719 = vadd.f32 %v315, %v475
        %v720 = vadd.f32 %v316, %v540
        %v721 = vadd.f32 %v317, %v605
        %v722 = vadd.f32 %v318, %v670
        %v723 = vadd.f32 %v319, %v478
        %v724 = vadd.f32 %v320, %v543
        %v725 = vadd.f32 %v321, %v608
        %v726 = vadd.f32 %v322, %v673
        %v727 = vadd.f32 %v323, %v481
        %v728 = vadd.f32 %v324, %v546
        %v729 = vadd.f32 %v325, %v611
        %v730 = vadd.f32 %v326, %v676
        %v731 = vadd.f32 %v327, %v484
        %v732 = vadd.f32 %v328, %v549
        %v733 = vadd.f32 %v329, %v614
        %v734 = vadd.f32 %v330, %v679
        %v735 = vadd.f32 %v331, %v487
        %v736 = vadd.f32 %v332, %v552
        %v737 = vadd.f32 %v333, %v617
        %v738 = vadd.f32 %v334, %v682
        %v739 = vadd.f32 %v335, %v490
        %v740 = vadd.f32 %v336, %v555
        %v741 = vadd.f32 %v337, %v620
        %v742 = vadd.f32 %v338, %v685
        %v743 = vadd.f32 %v339, %v493
        %v744 = vadd.f32 %v340, %v558
        %v745 = vadd.f32 %v341, %v623
        %v746 = vadd.f32 %v342, %v688
        %v747 = vadd.f32 %v343, %v496
        %v748 = vadd.f32 %v344, %v561
        %v749 = vadd.f32 %v345, %v626
        %v750 = vadd.f32 %v346, %v691
        %v751 = vadd.f32 %v347, %v499
        %v752 = vadd.f32 %v348, %v564
        %v753 = vadd.f32 %v349, %v629
        %v754 = vadd.f32 %v350, %v694
        %v755 = vadd.f32 %v351, %v502
        %v756 = vadd.f32 %v352, %v567
        %v757 = vadd.f32 %v353, %v632
        %v758 = vadd.f32 %v354, %v697
        %v759 = vadd.f32 %v355, %v505
        %v760 = vadd.f32 %v356, %v570
        %v761 = vadd.f32 %v357, %v635
        %v762 = vadd.f32 %v358, %v700
        %v763 = vadd.f32 %v359, %v508
        %v764 = vadd.f32 %v360, %v573
        %v765 = vadd.f32 %v361, %v638
        %v766 = vadd.f32 %v362, %v703
        %v767 = vadd.f32 %v363, %v511
        %v768 = vadd.f32 %v364, %v576
        %v769 = vadd.f32 %v365, %v641
        %v770 = vadd.f32 %v366, %v706
        %v771 = vadd.f32 %v367, %v514
        %v772 = vadd.f32 %v368, %v579
        %v773 = vadd.f32 %v369, %v644
        %v774 = vadd.f32 %v370, %v709
        %775 = vst [vmem:[#allocation2] sm:$0xff] %v711
        %776 = vst [vmem:[#allocation2 + $0x8] sm:$0xff] %v712
        %777 = vst [vmem:[#allocation2 + $0x10] sm:$0xff] %v713
        %778 = vst [vmem:[#allocation2 + $0x18] sm:$0xff] %v714
        %779 = vst [vmem:[#allocation2 + $0x20] sm:$0xff] %v715
        %780 = vst [vmem:[#allocation2 + $0x28] sm:$0xff] %v716
        %781 = vst [vmem:[#allocation2 + $0x30] sm:$0xff] %v717
        %782 = vst [vmem:[#allocation2 + $0x38] sm:$0xff] %v718
        %783 = vst [vmem:[#allocation2 + $0x40] sm:$0xff] %v719
        %784 = vst [vmem:[#allocation2 + $0x48] sm:$0xff] %v720
        %785 = vst [vmem:[#allocation2 + $0x50] sm:$0xff] %v721
        %786 = vst [vmem:[#allocation2 + $0x58] sm:$0xff] %v722
        %787 = vst [vmem:[#allocation2 + $0x60] sm:$0xff] %v723
        %788 = vst [vmem:[#allocation2 + $0x68] sm:$0xff] %v724
        %789 = vst [vmem:[#allocation2 + $0x70] sm:$0xff] %v725
        %790 = vst [vmem:[#allocation2 + $0x78] sm:$0xff] %v726
        %791 = vst [vmem:[#allocation2 + $0x80] sm:$0xff] %v727
        %792 = vst [vmem:[#allocation2 + $0x88] sm:$0xff] %v728
        %793 = vst [vmem:[#allocation2 + $0x90] sm:$0xff] %v729
        %794 = vst [vmem:[#allocation2 + $0x98] sm:$0xff] %v730
        %795 = vst [vmem:[#allocation2 + $0xa0] sm:$0xff] %v731
        %796 = vst [vmem:[#allocation2 + $0xa8] sm:$0xff] %v732
        %797 = vst [vmem:[#allocation2 + $0xb0] sm:$0xff] %v733
        %798 = vst [vmem:[#allocation2 + $0xb8] sm:$0xff] %v734
        %799 = vst [vmem:[#allocation2 + $0xc0] sm:$0xff] %v735
        %800 = vst [vmem:[#allocation2 + $0xc8] sm:$0xff] %v736
        %801 = vst [vmem:[#allocation2 + $0xd0] sm:$0xff] %v737
        %802 = vst [vmem:[#allocation2 + $0xd8] sm:$0xff] %v738
        %803 = vst [vmem:[#allocation2 + $0xe0] sm:$0xff] %v739
        %804 = vst [vmem:[#allocation2 + $0xe8] sm:$0xff] %v740
        %805 = vst [vmem:[#allocation2 + $0xf0] sm:$0xff] %v741
        %806 = vst [vmem:[#allocation2 + $0xf8] sm:$0xff] %v742
        %807 = vst [vmem:[#allocation2 + $0x100] sm:$0xff] %v743
        %808 = vst [vmem:[#allocation2 + $0x108] sm:$0xff] %v744
        %809 = vst [vmem:[#allocation2 + $0x110] sm:$0xff] %v745
        %810 = vst [vmem:[#allocation2 + $0x118] sm:$0xff] %v746
        %811 = vst [vmem:[#allocation2 + $0x120] sm:$0xff] %v747
        %812 = vst [vmem:[#allocation2 + $0x128] sm:$0xff] %v748
        %813 = vst [vmem:[#allocation2 + $0x130] sm:$0xff] %v749
        %814 = vst [vmem:[#allocation2 + $0x138] sm:$0xff] %v750
        %815 = vst [vmem:[#allocation2 + $0x140] sm:$0xff] %v751
        %816 = vst [vmem:[#allocation2 + $0x148] sm:$0xff] %v752
        %817 = vst [vmem:[#allocation2 + $0x150] sm:$0xff] %v753
        %818 = vst [vmem:[#allocation2 + $0x158] sm:$0xff] %v754
        %819 = vst [vmem:[#allocation2 + $0x160] sm:$0xff] %v755
        %820 = vst [vmem:[#allocation2 + $0x168] sm:$0xff] %v756
        %821 = vst [vmem:[#allocation2 + $0x170] sm:$0xff] %v757
        %822 = vst [vmem:[#allocation2 + $0x178] sm:$0xff] %v758
        %823 = vst [vmem:[#allocation2 + $0x180] sm:$0xff] %v759
        %824 = vst [vmem:[#allocation2 + $0x188] sm:$0xff] %v760
        %825 = vst [vmem:[#allocation2 + $0x190] sm:$0xff] %v761
        %826 = vst [vmem:[#allocation2 + $0x198] sm:$0xff] %v762
        %827 = vst [vmem:[#allocation2 + $0x1a0] sm:$0xff] %v763
        %828 = vst [vmem:[#allocation2 + $0x1a8] sm:$0xff] %v764
        %829 = vst [vmem:[#allocation2 + $0x1b0] sm:$0xff] %v765
        %830 = vst [vmem:[#allocation2 + $0x1b8] sm:$0xff] %v766
        %831 = vst [vmem:[#allocation2 + $0x1c0] sm:$0xff] %v767
        %832 = vst [vmem:[#allocation2 + $0x1c8] sm:$0xff] %v768
        %833 = vst [vmem:[#allocation2 + $0x1d0] sm:$0xff] %v769
        %834 = vst [vmem:[#allocation2 + $0x1d8] sm:$0xff] %v770
        %835 = vst [vmem:[#allocation2 + $0x1e0] sm:$0xff] %v771
        %836 = vst [vmem:[#allocation2 + $0x1e8] sm:$0xff] %v772
        %837 = vst [vmem:[#allocation2 + $0x1f0] sm:$0xff] %v773
        %838 = vst [vmem:[#allocation2 + $0x1f8] sm:$0xff] %v774
        %p839 = scmp.eq.s32.totalorder %s29, 1
        // Predicated region
        $region41: #{tpu_custom_call.1} parent=27 // pred_check
          %p840 = pneg %p839
        $region42: #{tpu_custom_call.1} parent=27 // pred_check_branch
          %842 = sbr.rel (%p840) target = $region44
        $region43: #{tpu_custom_call.1} parent=27 // pred_region
          %v843 = vld [vmem:[#allocation2] sm:$0xff]
          %v844 = vld [vmem:[#allocation2 + $0x8] sm:$0xff]
          %v845 = vld [vmem:[#allocation2 + $0x10] sm:$0xff]
          %v846 = vld [vmem:[#allocation2 + $0x18] sm:$0xff]
          %v847 = vld [vmem:[#allocation2 + $0x20] sm:$0xff]
          %v848 = vld [vmem:[#allocation2 + $0x28] sm:$0xff]
          %v849 = vld [vmem:[#allocation2 + $0x30] sm:$0xff]
          %v850 = vld [vmem:[#allocation2 + $0x38] sm:$0xff]
          %v851 = vld [vmem:[#allocation2 + $0x40] sm:$0xff]
          %v852 = vld [vmem:[#allocation2 + $0x48] sm:$0xff]
          %v853 = vld [vmem:[#allocation2 + $0x50] sm:$0xff]
          %v854 = vld [vmem:[#allocation2 + $0x58] sm:$0xff]
          %v855 = vld [vmem:[#allocation2 + $0x60] sm:$0xff]
          %v856 = vld [vmem:[#allocation2 + $0x68] sm:$0xff]
          %v857 = vld [vmem:[#allocation2 + $0x70] sm:$0xff]
          %v858 = vld [vmem:[#allocation2 + $0x78] sm:$0xff]
          %v859 = vld [vmem:[#allocation2 + $0x80] sm:$0xff]
          %v860 = vld [vmem:[#allocation2 + $0x88] sm:$0xff]
          %v861 = vld [vmem:[#allocation2 + $0x90] sm:$0xff]
          %v862 = vld [vmem:[#allocation2 + $0x98] sm:$0xff]
          %v863 = vld [vmem:[#allocation2 + $0xa0] sm:$0xff]
          %v864 = vld [vmem:[#allocation2 + $0xa8] sm:$0xff]
          %v865 = vld [vmem:[#allocation2 + $0xb0] sm:$0xff]
          %v866 = vld [vmem:[#allocation2 + $0xb8] sm:$0xff]
          %v867 = vld [vmem:[#allocation2 + $0xc0] sm:$0xff]
          %v868 = vld [vmem:[#allocation2 + $0xc8] sm:$0xff]
          %v869 = vld [vmem:[#allocation2 + $0xd0] sm:$0xff]
          %v870 = vld [vmem:[#allocation2 + $0xd8] sm:$0xff]
          %v871 = vld [vmem:[#allocation2 + $0xe0] sm:$0xff]
          %v872 = vld [vmem:[#allocation2 + $0xe8] sm:$0xff]
          %v873 = vld [vmem:[#allocation2 + $0xf0] sm:$0xff]
          %v874 = vld [vmem:[#allocation2 + $0xf8] sm:$0xff]
          %v875 = vld [vmem:[#allocation2 + $0x100] sm:$0xff]
          %v876 = vld [vmem:[#allocation2 + $0x108] sm:$0xff]
          %v877 = vld [vmem:[#allocation2 + $0x110] sm:$0xff]
          %v878 = vld [vmem:[#allocation2 + $0x118] sm:$0xff]
          %v879 = vld [vmem:[#allocation2 + $0x120] sm:$0xff]
          %v880 = vld [vmem:[#allocation2 + $0x128] sm:$0xff]
          %v881 = vld [vmem:[#allocation2 + $0x130] sm:$0xff]
          %v882 = vld [vmem:[#allocation2 + $0x138] sm:$0xff]
          %v883 = vld [vmem:[#allocation2 + $0x140] sm:$0xff]
          %v884 = vld [vmem:[#allocation2 + $0x148] sm:$0xff]
          %v885 = vld [vmem:[#allocation2 + $0x150] sm:$0xff]
          %v886 = vld [vmem:[#allocation2 + $0x158] sm:$0xff]
          %v887 = vld [vmem:[#allocation2 + $0x160] sm:$0xff]
          %v888 = vld [vmem:[#allocation2 + $0x168] sm:$0xff]
          %v889 = vld [vmem:[#allocation2 + $0x170] sm:$0xff]
          %v890 = vld [vmem:[#allocation2 + $0x178] sm:$0xff]
          %v891 = vld [vmem:[#allocation2 + $0x180] sm:$0xff]
          %v892 = vld [vmem:[#allocation2 + $0x188] sm:$0xff]
          %v893 = vld [vmem:[#allocation2 + $0x190] sm:$0xff]
          %v894 = vld [vmem:[#allocation2 + $0x198] sm:$0xff]
          %v895 = vld [vmem:[#allocation2 + $0x1a0] sm:$0xff]
          %v896 = vld [vmem:[#allocation2 + $0x1a8] sm:$0xff]
          %v897 = vld [vmem:[#allocation2 + $0x1b0] sm:$0xff]
          %v898 = vld [vmem:[#allocation2 + $0x1b8] sm:$0xff]
          %v899 = vld [vmem:[#allocation2 + $0x1c0] sm:$0xff]
          %v900 = vld [vmem:[#allocation2 + $0x1c8] sm:$0xff]
          %v901 = vld [vmem:[#allocation2 + $0x1d0] sm:$0xff]
          %v902 = vld [vmem:[#allocation2 + $0x1d8] sm:$0xff]
          %v903 = vld [vmem:[#allocation2 + $0x1e0] sm:$0xff]
          %v904 = vld [vmem:[#allocation2 + $0x1e8] sm:$0xff]
          %v905 = vld [vmem:[#allocation2 + $0x1f0] sm:$0xff]
          %v906 = vld [vmem:[#allocation2 + $0x1f8] sm:$0xff]
          %907 = vst [vmem:[%s234] sm:$0xff] %v843
          %908 = vst [vmem:[%s234 + $0x8] sm:$0xff] %v844
          %909 = vst [vmem:[%s234 + $0x10] sm:$0xff] %v845
          %910 = vst [vmem:[%s234 + $0x18] sm:$0xff] %v846
          %911 = vst [vmem:[%s234 + $0x20] sm:$0xff] %v847
          %912 = vst [vmem:[%s234 + $0x28] sm:$0xff] %v848
          %913 = vst [vmem:[%s234 + $0x30] sm:$0xff] %v849
          %914 = vst [vmem:[%s234 + $0x38] sm:$0xff] %v850
          %915 = vst [vmem:[%s234 + $0x40] sm:$0xff] %v851
          %916 = vst [vmem:[%s234 + $0x48] sm:$0xff] %v852
          %917 = vst [vmem:[%s234 + $0x50] sm:$0xff] %v853
          %918 = vst [vmem:[%s234 + $0x58] sm:$0xff] %v854
          %919 = vst [vmem:[%s234 + $0x60] sm:$0xff] %v855
          %920 = vst [vmem:[%s234 + $0x68] sm:$0xff] %v856
          %921 = vst [vmem:[%s234 + $0x70] sm:$0xff] %v857
          %922 = vst [vmem:[%s234 + $0x78] sm:$0xff] %v858
          %923 = vst [vmem:[%s234 + $0x80] sm:$0xff] %v859
          %924 = vst [vmem:[%s234 + $0x88] sm:$0xff] %v860
          %925 = vst [vmem:[%s234 + $0x90] sm:$0xff] %v861
          %926 = vst [vmem:[%s234 + $0x98] sm:$0xff] %v862
          %927 = vst [vmem:[%s234 + $0xa0] sm:$0xff] %v863
          %928 = vst [vmem:[%s234 + $0xa8] sm:$0xff] %v864
          %929 = vst [vmem:[%s234 + $0xb0] sm:$0xff] %v865
          %930 = vst [vmem:[%s234 + $0xb8] sm:$0xff] %v866
          %931 = vst [vmem:[%s234 + $0xc0] sm:$0xff] %v867
          %932 = vst [vmem:[%s234 + $0xc8] sm:$0xff] %v868
          %933 = vst [vmem:[%s234 + $0xd0] sm:$0xff] %v869
          %934 = vst [vmem:[%s234 + $0xd8] sm:$0xff] %v870
          %935 = vst [vmem:[%s234 + $0xe0] sm:$0xff] %v871
          %936 = vst [vmem:[%s234 + $0xe8] sm:$0xff] %v872
          %937 = vst [vmem:[%s234 + $0xf0] sm:$0xff] %v873
          %938 = vst [vmem:[%s234 + $0xf8] sm:$0xff] %v874
          %939 = vst [vmem:[%s234 + $0x100] sm:$0xff] %v875
          %940 = vst [vmem:[%s234 + $0x108] sm:$0xff] %v876
          %941 = vst [vmem:[%s234 + $0x110] sm:$0xff] %v877
          %942 = vst [vmem:[%s234 + $0x118] sm:$0xff] %v878
          %943 = vst [vmem:[%s234 + $0x120] sm:$0xff] %v879
          %944 = vst [vmem:[%s234 + $0x128] sm:$0xff] %v880
          %945 = vst [vmem:[%s234 + $0x130] sm:$0xff] %v881
          %946 = vst [vmem:[%s234 + $0x138] sm:$0xff] %v882
          %947 = vst [vmem:[%s234 + $0x140] sm:$0xff] %v883
          %948 = vst [vmem:[%s234 + $0x148] sm:$0xff] %v884
          %949 = vst [vmem:[%s234 + $0x150] sm:$0xff] %v885
          %950 = vst [vmem:[%s234 + $0x158] sm:$0xff] %v886
          %951 = vst [vmem:[%s234 + $0x160] sm:$0xff] %v887
          %952 = vst [vmem:[%s234 + $0x168] sm:$0xff] %v888
          %953 = vst [vmem:[%s234 + $0x170] sm:$0xff] %v889
          %954 = vst [vmem:[%s234 + $0x178] sm:$0xff] %v890
          %955 = vst [vmem:[%s234 + $0x180] sm:$0xff] %v891
          %956 = vst [vmem:[%s234 + $0x188] sm:$0xff] %v892
          %957 = vst [vmem:[%s234 + $0x190] sm:$0xff] %v893
          %958 = vst [vmem:[%s234 + $0x198] sm:$0xff] %v894
          %959 = vst [vmem:[%s234 + $0x1a0] sm:$0xff] %v895
          %960 = vst [vmem:[%s234 + $0x1a8] sm:$0xff] %v896
          %961 = vst [vmem:[%s234 + $0x1b0] sm:$0xff] %v897
          %962 = vst [vmem:[%s234 + $0x1b8] sm:$0xff] %v898
          %963 = vst [vmem:[%s234 + $0x1c0] sm:$0xff] %v899
          %964 = vst [vmem:[%s234 + $0x1c8] sm:$0xff] %v900
          %965 = vst [vmem:[%s234 + $0x1d0] sm:$0xff] %v901
          %966 = vst [vmem:[%s234 + $0x1d8] sm:$0xff] %v902
          %967 = vst [vmem:[%s234 + $0x1e0] sm:$0xff] %v903
          %968 = vst [vmem:[%s234 + $0x1e8] sm:$0xff] %v904
          %969 = vst [vmem:[%s234 + $0x1f0] sm:$0xff] %v905
          %970 = vst [vmem:[%s234 + $0x1f8] sm:$0xff] %v906
        $region44: #{tpu_custom_call.1} parent=27 // pred_fallthru
          _
        %s971 = sand.u32 %s107, 1
        %s972 = scalar_lea.sflag [#allocation5], %s971
        %s973 = sand.u32 %s107, 1
        %s974 = smul.addr %s973, 512
        %s975 = scalar_lea.vmem [#allocation8], %s974
        // Predicated region
        $region45: #{tpu_custom_call.1} parent=27 // pred_check
          %p976 = pneg %p117
        $region46: #{tpu_custom_call.1} parent=27 // pred_check_branch
          %978 = sbr.rel (%p976) target = $region48
        $region47: #{tpu_custom_call.1} parent=27 // pred_region
          %s979 = smul.u32 16, %s27
          %s980 = smul.u32 4, %s28
          %982 = vsyncadd %s972, 0
          %s983 = smul.addr %s979, 8
          %s984 = sadd.s32 %s980, %s983
          %s985 = smul.addr %s984, 8
          %s986 = scalar_lea.hbm %s2, %s985
          %s987 = sshll.u32 %s975, 4
          %s988 = int_to_ptr.vmem [resolvable:$true] %s987
          %s989 = sshll.u32 %s986, 4
          %s990 = int_to_ptr.hbm [resolvable:$true] %s989
          %995 = dma.vmem_to_hbm [thread:$0]  %s988, 8192, %s990, %s972, 512, 1024, 32
        $region48: #{tpu_custom_call.1} parent=27 // pred_fallthru
          _
      $region28: #{tpu_custom_call.1} parent=5 // pred_fallthru
        _
      %p996 = scmp.le.s32.totalorder 2, %s17
      // Predicated region
      $region49: #{tpu_custom_call.1} parent=5 // pred_check
        %p997 = pneg %p996
      $region50: #{tpu_custom_call.1} parent=5 // pred_check_branch
        %999 = sbr.rel (%p997) target = $region52
      $region51: #{tpu_custom_call.1} parent=5 // pred_region
        %s1000 = ssub.s32 %s17, 2
        // Predicated region
        $region53: #{tpu_custom_call.1} parent=51 // pred_check
          %p1001 = pneg %p123
        $region54: #{tpu_custom_call.1} parent=51 // pred_check_branch
          %1003 = sbr.rel (%p1001) target = $region56
        $region55: #{tpu_custom_call.1} parent=51 // pred_region
          %s1004 = sand.u32 %s108, 1
          %s1005 = scalar_lea.sflag [#allocation5], %s1004
          %s1006 = sand.u32 %s108, 1
          %s1007 = smul.addr %s1006, 512
          %s1008 = scalar_lea.vmem [#allocation8], %s1007
          %1010 = dma.done %s1005, 8192
        $region56: #{tpu_custom_call.1} parent=51 // pred_fallthru
          _
      $region52: #{tpu_custom_call.1} parent=5 // pred_fallthru
        _
    $region6: #{tpu_custom_call.1} parent=1 // loop_footer
      %s21 = sadd.s32 1, %s17
    $region7: #{tpu_custom_call.1} parent=1 // loop_footer_branch
      %16 = sbr.rel target = $region3
    $region8: #{tpu_custom_call.1} parent=1 // loop_exit
      _
    %1011 = vsyncpa [#allocation4], 1
    %s1012 = scalar_lea.sflag [#allocation4], 1
    %1013 = vsyncpa %s1012, 1
    %1014 = vsyncpa [#allocation7], 1
    %s1015 = scalar_lea.sflag [#allocation7], 1
    %1016 = vsyncpa %s1015, 1
    %1017 = vsyncpa [#allocation5], 1
    %s1018 = scalar_lea.sflag [#allocation5], 1
    %1019 = vsyncpa %s1018, 1

</llo_original>
